<compile_context>
chip_gen: v7x
topology: tpu7x:2x2x1
jax: 0.10.0
libtpu: 0.0.40
codegen_flags: <defaults>
</compile_context>

<pallas_src>
import functools

import jax
import jax.numpy as jnp
from jax.experimental import pallas as pl
from jax.experimental.pallas import tpu as pltpu

_OUT_PAD = 128  # lane-dense padded width for the 3-class head


def _round_up(x, m):
    return ((x + m - 1) // m) * m


# ----------------------------------------------------------------------------
# Kernel body
# ----------------------------------------------------------------------------
def _verify_kernel(cas_ref, mask_ref, wm_ref, bm_ref, wu_ref, wout_ref,
                   bout_ref, out_ref, *, mxu_dtype):
    Bt, T, D = cas_ref.shape
    cas = cas_ref[...]                                 # (Bt, T, D)
    cas_f32 = cas.astype(jnp.float32)
    mask = mask_ref[...]                               # (Bt, T) f32

    # --- attn_m + tanh: one fused MXU matmul over the flattened (Bt*T, D)
    # rows.  T % 8 == 0 (wrapper pads), so the reshape is a free sublane
    # merge.  MXU operands in bf16 by default (f32 accumulation); all
    # VPU/EUP math stays f32.
    # NOTE: for D < 128 a further VPU/EUP saving is possible by packing
    # k = 128/D rows per vreg against a block-diagonal wm; skipped because
    # the kernel is HBM-bandwidth bound.
    x = cas.reshape(Bt * T, D).astype(mxu_dtype)
    z = jnp.dot(x, wm_ref[...].astype(mxu_dtype),
                preferred_element_type=jnp.float32) + bm_ref[...]
    m = jnp.tanh(z)                                    # (Bt*T, D) f32

    # --- attn_u: N=1 contraction on VPU (multiply) + XLU (lane reduce).
    scores = jnp.sum(m * wu_ref[...], axis=-1).reshape(Bt, T)

    # --- masked exp + normalize.  The row-max subtraction cancels exactly in
    # the normalization, so forward semantics match the reference while
    # avoiding overflow for large scores.  (An all-zero mask row yields
    # inf/NaN, exactly like the PyTorch reference.)
    smax = jnp.max(scores, axis=1, keepdims=True)
    e = jnp.exp(scores - smax) * mask                  # (Bt, T)
    denom = jnp.sum(e, axis=1, keepdims=True)
    u = e * pl.reciprocal(denom, approx=False)

    # --- weighted sequence pooling: broadcast-multiply + sublane reduce
    # (avoids an M=1 MXU matmul per batch row).
    s = jnp.sum(cas_f32 * u[:, :, None], axis=1)       # (Bt, D) f32

    # --- final linear head (lane-dense, padded to 128 output lanes).
    y = jnp.dot(s, wout_ref[...], preferred_element_type=jnp.float32) \
        + bout_ref[...]
    out_ref[...] = y.astype(out_ref.dtype)


# ----------------------------------------------------------------------------
# Generation-dependent VMEM budget and batch-tile selection
# ----------------------------------------------------------------------------
def _vmem_budget():
    """Returns (target padded bytes per cas buffer, vmem_limit_bytes)."""
    try:
        info = pltpu.get_tpu_info()
        phys = int(getattr(info, "vmem_capacity_bytes", 64 << 20))
    except Exception:
        phys = 64 << 20  # conservative fallback (covers v7x per-core VMEM)
    if phys >= (128 << 20):        # v5e / v6e: 128 MiB physical VMEM
        return 8 << 20, 64 << 20
    else:                          # v7x: 64 MiB physical VMEM per core
        return 6 << 20, 48 << 20


def _choose_batch_tile(B, Tp, D, cas_itemsize, target_tile_bytes, vmem_limit):
    """Largest batch tile whose *padded* VMEM footprint fits the budget."""
    Dp = _round_up(D, 128)         # lane padding of the D axis
    Tl = _round_up(Tp, 128)        # lane padding of the mask T axis
    # Per-batch-row padded bytes: 2x streamed cas buffers, ~3 tile-sized f32
    # intermediates (z/m, u-broadcast, weighted cas), 2x mask, 2x output.
    per_row = (2 * Tp * Dp * cas_itemsize
               + 3 * Tp * Dp * 4
               + 2 * Tl * 4
               + 2 * _OUT_PAD * 4)
    D8 = _round_up(D, 8)
    # Resident weights (wm, bm, wu, wout, bout) are still double-buffered by
    # the pipeline; account for both buffers.
    fixed = 2 * 4 * (D8 * Dp + 2 * 8 * Dp + D8 * _OUT_PAD + 8 * _OUT_PAD)
    budget_rows = max(8, int((0.8 * vmem_limit - fixed) // per_row))
    target_rows = max(8, int(target_tile_bytes // (Tp * Dp * cas_itemsize)))
    bt = max(8, (min(budget_rows, target_rows) // 8) * 8)
    if B >= 16:
        # >= 2 grid steps so the "parallel" batch axis can split across the
        # two v7x TensorCores (no effect on single-TC v5e/v6e).
        bt = min(bt, _round_up(pl.cdiv(B, 2), 8))
    if B <= bt:
        return B                   # single full-batch tile, grid = 1
    return bt


# ----------------------------------------------------------------------------
# Wrapper
# ----------------------------------------------------------------------------
def verify_forward(cas, cas_mask, wm, bm, wu, wout, bout, *,
                   mxu_bf16=True, stream_bf16=False):
    """cas: (B, T, D) ; cas_mask: (B, T).
    wm: (D, D) = attn_m.weight^T, bm: (1, D), wu: (D, 1) = attn_u.weight^T,
    wout: (D, 3) = out.weight^T, bout: (1, 3).  Returns (B, 3) f32.

    mxu_bf16:   feed the big matmul to the MXU in bf16 (f32 accumulate).
    stream_bf16: stream cas from HBM in bf16 (halves HBM traffic; lossy)."""
    B, T, D = cas.shape
    cas_dtype = jnp.bfloat16 if stream_bf16 else jnp.float32
    mxu_dtype = jnp.bfloat16 if mxu_bf16 else jnp.float32

    cas = cas.astype(cas_dtype)
    cas_mask = cas_mask.astype(jnp.float32)

    # Pad T to a multiple of 8 (zero cas / zero mask -> no contribution) so
    # the in-kernel reshape is a free sublane merge.
    Tp = _round_up(T, 8)
    if Tp != T:
        cas = jnp.pad(cas, ((0, 0), (0, Tp - T), (0, 0)))
        cas_mask = jnp.pad(cas_mask, ((0, 0), (0, Tp - T)))

    # Small-weight layout: wu as a (1, D) row; head weights zero-padded to a
    # lane-dense 128-wide output (wrapper slices [:, :3]).
    wm = wm.astype(jnp.float32)
    bm = bm.reshape(1, D).astype(jnp.float32)
    wu_row = wu.reshape(1, D).astype(jnp.float32)
    wout_p = jnp.zeros((D, _OUT_PAD), jnp.float32).at[:, :3].set(
        wout.astype(jnp.float32))
    bout_p = jnp.zeros((1, _OUT_PAD), jnp.float32).at[:, :3].set(
        bout.reshape(1, 3).astype(jnp.float32))

    cas_itemsize = jnp.dtype(cas_dtype).itemsize
    target_tile, vmem_limit = _vmem_budget()
    Bt = _choose_batch_tile(B, Tp, D, cas_itemsize, target_tile, vmem_limit)

    # Pad the batch to a multiple of the tile.  Padded mask rows are 1.0 so
    # the softmax denominator of the (discarded) pad rows stays finite.
    Bp = pl.cdiv(B, Bt) * Bt
    if Bp != B:
        cas = jnp.pad(cas, ((0, Bp - B), (0, 0), (0, 0)))
        cas_mask = jnp.pad(cas_mask, ((0, Bp - B), (0, 0)),
                           constant_values=1.0)

    grid = (Bp // Bt,)

    cost = pl.CostEstimate(
        flops=int(2 * Bp * Tp * D * D + 6 * Bp * Tp * D
                  + 2 * Bp * D * _OUT_PAD),
        transcendentals=int(Bp * Tp * D + Bp * Tp),
        bytes_accessed=int(cas_itemsize * Bp * Tp * D
                           + 4 * (Bp * Tp + D * D + 2 * D + D * _OUT_PAD
                                  + _OUT_PAD + Bp * _OUT_PAD)),
    )

    kernel = functools.partial(_verify_kernel, mxu_dtype=mxu_dtype)

    out_padded = pl.pallas_call(
        kernel,
        out_shape=jax.ShapeDtypeStruct((Bp, _OUT_PAD), jnp.float32),
        grid=grid,
        in_specs=[
            pl.BlockSpec((Bt, Tp, D), lambda i: (i, 0, 0)),       # cas (streamed)
            pl.BlockSpec((Bt, Tp), lambda i: (i, 0)),             # mask (streamed)
            pl.BlockSpec((D, D), lambda i: (0, 0)),               # wm   (resident)
            pl.BlockSpec((1, D), lambda i: (0, 0)),               # bm   (resident)
            pl.BlockSpec((1, D), lambda i: (0, 0)),               # wu   (resident)
            pl.BlockSpec((D, _OUT_PAD), lambda i: (0, 0)),        # wout (resident)
            pl.BlockSpec((1, _OUT_PAD), lambda i: (0, 0)),        # bout (resident)
        ],
        out_specs=pl.BlockSpec((Bt, _OUT_PAD), lambda i: (i, 0)),
        compiler_params=pltpu.CompilerParams(
            dimension_semantics=("parallel",),                    # megacore on v7x
            vmem_limit_bytes=int(vmem_limit)),
        cost_estimate=cost,
    )(cas, cas_mask, wm, bm, wu_row, wout_p, bout_p)

    return out_padded[:B, :3]


# ----------------------------------------------------------------------------
# Pure-JAX reference (matches the PyTorch module)
# ----------------------------------------------------------------------------
def verify_reference(cas, cas_mask, wm, bm, wu, wout, bout):
    z = jnp.tanh(jnp.einsum('btd,de->bte', cas, wm) + bm[None, :, :])
    scores = jnp.einsum('btd,de->bte', z, wu)[..., 0]
    e = jnp.exp(scores) * cas_mask
    u = e / jnp.sum(e, axis=1, keepdims=True)
    s = jnp.einsum('bt,btd->bd', u, cas)
    return s @ wout + bout


if __name__ == "__main__":
    # Shapes consistent with the module: hidden_size=16 -> D = 2*16 = 32.
    T, H = 8, 16
    D = 2 * H

    key = jax.random.PRNGKey(0)
    k_cas, k_mask, k_wm, k_bm, k_wu, k_wout, k_bout = jax.random.split(key, 7)

    # Deterministic parameters (PyTorch nn.Linear shapes, pre-transposed).
    scale = 1.0 / jnp.sqrt(jnp.float32(D))
    wm = jax.random.uniform(k_wm, (D, D), minval=-scale, maxval=scale)      # attn_m.weight^T
    bm = jax.random.uniform(k_bm, (1, D), minval=-scale, maxval=scale)      # attn_m.bias
    wu = jax.random.uniform(k_wu, (D, 1), minval=-scale, maxval=scale)      # attn_u.weight^T
    wout = jax.random.uniform(k_wout, (D, 3), minval=-scale, maxval=scale)  # out.weight^T
    bout = jax.random.uniform(k_bout, (1, 3), minval=-scale, maxval=scale)  # out.bias

    # --- case 1: small batch (B=2), grid of 1 tile ----------------------------
    B = 2
    cas = jax.random.normal(k_cas, (B, T, D), dtype=jnp.float32)
    mask = (jax.random.uniform(k_mask, (B, T)) > 0.3).astype(jnp.float32)
    mask = mask.at[:, 0].set(1.0)
    ref = verify_reference(cas, mask, wm, bm, wu, wout, bout)

    # exact f32 path
    y_f32 = verify_forward(cas, mask, wm, bm, wu, wout, bout, mxu_bf16=False)
    jax.block_until_ready(y_f32)
    assert y_f32.shape == (B, 3)
    assert jnp.allclose(y_f32, ref, atol=1e-5, rtol=1e-5), (y_f32, ref)

    # default path (bf16 MXU operands, f32 accumulate) -> looser tolerance
    y_bf16 = verify_forward(cas, mask, wm, bm, wu, wout, bout)
    jax.block_until_ready(y_bf16)
    assert jnp.allclose(y_bf16, ref, atol=3e-2, rtol=3e-2), (y_bf16, ref)

    # optional bf16 streaming of cas (HBM-traffic halving; lossy)
    y_stream = verify_forward(cas, mask, wm, bm, wu, wout, bout,
                              stream_bf16=True)
    jax.block_until_ready(y_stream)
    assert jnp.allclose(y_stream, ref, atol=3e-2, rtol=3e-2), (y_stream, ref)

    # --- case 2: larger batch (B=24) exercises the multi-step grid + padding --
    B2 = 24
    cas2 = jax.random.normal(jax.random.PRNGKey(1), (B2, T, D), jnp.float32)
    mask2 = (jax.random.uniform(jax.random.PRNGKey(2), (B2, T)) > 0.3
             ).astype(jnp.float32)
    mask2 = mask2.at[:, 0].set(1.0)
    ref2 = verify_reference(cas2, mask2, wm, bm, wu, wout, bout)
    y2 = verify_forward(cas2, mask2, wm, bm, wu, wout, bout, mxu_bf16=False)
    jax.block_until_ready(y2)
    assert y2.shape == (B2, 3)
    assert jnp.allclose(y2, ref2, atol=1e-5, rtol=1e-5), (y2, ref2)

    print("KERNEL_OK")
</pallas_src>

<mosaic_0001>
module attributes {stable_mosaic.version = 11 : i64} {
  func.func @_verify_kernel(%arg0: i32, %arg1: memref<2x8x32xf32, #tpu.memory_space<vmem>>, %arg2: memref<2x8xf32, #tpu.memory_space<vmem>>, %arg3: memref<32x32xf32, #tpu.memory_space<vmem>>, %arg4: memref<1x32xf32, #tpu.memory_space<vmem>>, %arg5: memref<1x32xf32, #tpu.memory_space<vmem>>, %arg6: memref<32x128xf32, #tpu.memory_space<vmem>>, %arg7: memref<1x128xf32, #tpu.memory_space<vmem>>, %arg8: memref<2x128xf32, #tpu.memory_space<vmem>>) attributes {dimension_semantics = [#tpu.dimension_semantics<parallel>], iteration_bounds = array<i64: 1>, scalar_prefetch = 0 : i64, scratch_operands = 0 : i64, tpu.core_type = #tpu.core_type<tc>, window_params = [{transform_indices = @transform_0, window_bounds = array<i64: 2, 8, 32>}, {transform_indices = @transform_1, window_bounds = array<i64: 2, 8>}, {pipeline_mode = #tpu.pipeline_mode<synchronous>, transform_indices = @transform_2, window_bounds = array<i64: 32, 32>}, {pipeline_mode = #tpu.pipeline_mode<synchronous>, transform_indices = @transform_3, window_bounds = array<i64: 1, 32>}, {pipeline_mode = #tpu.pipeline_mode<synchronous>, transform_indices = @transform_4, window_bounds = array<i64: 1, 32>}, {pipeline_mode = #tpu.pipeline_mode<synchronous>, transform_indices = @transform_5, window_bounds = array<i64: 32, 128>}, {pipeline_mode = #tpu.pipeline_mode<synchronous>, transform_indices = @transform_6, window_bounds = array<i64: 1, 128>}, {transform_indices = @transform_7, window_bounds = array<i64: 2, 128>}]} {
    %c0 = arith.constant 0 : index
    %c0_0 = arith.constant 0 : index
    %c0_1 = arith.constant 0 : index
    %0 = vector.load %arg1[%c0, %c0_0, %c0_1] : memref<2x8x32xf32, #tpu.memory_space<vmem>>, vector<2x8x32xf32>
    %c0_2 = arith.constant 0 : index
    %c0_3 = arith.constant 0 : index
    %1 = vector.load %arg2[%c0_2, %c0_3] : memref<2x8xf32, #tpu.memory_space<vmem>>, vector<2x8xf32>
    %2 = vector.shape_cast %0 : vector<2x8x32xf32> to vector<16x32xf32>
    %c0_4 = arith.constant 0 : index
    %c0_5 = arith.constant 0 : index
    %3 = vector.load %arg3[%c0_4, %c0_5] : memref<32x32xf32, #tpu.memory_space<vmem>>, vector<32x32xf32>
    %cst = arith.constant dense<0.000000e+00> : vector<16x32xf32>
    %4 = tpu.matmul %2, %3, %cst {dimension_numbers = #tpu.dot_dimension_numbers<[1], [0], [0], [1], [0, 0, 1, 1], [], []>} : vector<16x32xf32>, vector<32x32xf32>, vector<16x32xf32> -> vector<16x32xf32>
    %c0_6 = arith.constant 0 : index
    %c0_7 = arith.constant 0 : index
    %5 = vector.load %arg4[%c0_6, %c0_7] : memref<1x32xf32, #tpu.memory_space<vmem>>, vector<1x32xf32>
    %6 = vector.broadcast %5 : vector<1x32xf32> to vector<16x32xf32>
    %7 = arith.addf %4, %6 : vector<16x32xf32>
    %8 = math.tanh %7 : vector<16x32xf32>
    %c0_8 = arith.constant 0 : index
    %c0_9 = arith.constant 0 : index
    %9 = vector.load %arg5[%c0_8, %c0_9] : memref<1x32xf32, #tpu.memory_space<vmem>>, vector<1x32xf32>
    %10 = vector.broadcast %9 : vector<1x32xf32> to vector<16x32xf32>
    %11 = arith.mulf %8, %10 : vector<16x32xf32>
    %cst_10 = arith.constant dense<0.000000e+00> : vector<16xf32>
    %12 = vector.multi_reduction <add>, %11, %cst_10 [1] : vector<16x32xf32> to vector<16xf32>
    %13 = vector.shape_cast %12 : vector<16xf32> to vector<2x8xf32>
    %cst_11 = arith.constant dense<0xFF800000> : vector<2xf32>
    %14 = vector.multi_reduction <maximumf>, %13, %cst_11 [1] : vector<2x8xf32> to vector<2xf32>
    %15 = vector.shape_cast %14 : vector<2xf32> to vector<2x1xf32>
    %16 = vector.broadcast %15 : vector<2x1xf32> to vector<2x8xf32>
    %17 = arith.subf %13, %16 : vector<2x8xf32>
    %18 = math.exp %17 : vector<2x8xf32>
    %19 = arith.mulf %18, %1 : vector<2x8xf32>
    %cst_12 = arith.constant dense<0.000000e+00> : vector<2xf32>
    %20 = vector.multi_reduction <add>, %19, %cst_12 [1] : vector<2x8xf32> to vector<2xf32>
    %21 = vector.shape_cast %20 : vector<2xf32> to vector<2x1xf32>
    %22 = tpu.reciprocal %21 : vector<2x1xf32> -> vector<2x1xf32>
    %23 = vector.broadcast %22 : vector<2x1xf32> to vector<2x8xf32>
    %24 = arith.mulf %19, %23 : vector<2x8xf32>
    %25 = vector.shape_cast %24 : vector<2x8xf32> to vector<2x8x1xf32>
    %26 = vector.broadcast %25 : vector<2x8x1xf32> to vector<2x8x32xf32>
    %27 = arith.mulf %0, %26 : vector<2x8x32xf32>
    %cst_13 = arith.constant dense<0.000000e+00> : vector<2x32xf32>
    %28 = vector.multi_reduction <add>, %27, %cst_13 [1] : vector<2x8x32xf32> to vector<2x32xf32>
    %c0_14 = arith.constant 0 : index
    %c0_15 = arith.constant 0 : index
    %29 = vector.load %arg6[%c0_14, %c0_15] : memref<32x128xf32, #tpu.memory_space<vmem>>, vector<32x128xf32>
    %cst_16 = arith.constant dense<0.000000e+00> : vector<2x128xf32>
    %30 = tpu.matmul %28, %29, %cst_16 {dimension_numbers = #tpu.dot_dimension_numbers<[1], [0], [0], [1], [0, 0, 1, 1], [], []>} : vector<2x32xf32>, vector<32x128xf32>, vector<2x128xf32> -> vector<2x128xf32>
    %c0_17 = arith.constant 0 : index
    %c0_18 = arith.constant 0 : index
    %31 = vector.load %arg7[%c0_17, %c0_18] : memref<1x128xf32, #tpu.memory_space<vmem>>, vector<1x128xf32>
    %32 = vector.broadcast %31 : vector<1x128xf32> to vector<2x128xf32>
    %33 = arith.addf %30, %32 : vector<2x128xf32>
    %c0_19 = arith.constant 0 : index
    %c0_20 = arith.constant 0 : index
    %34 = vector.load %arg8[%c0_19, %c0_20] : memref<2x128xf32, #tpu.memory_space<vmem>>, vector<2x128xf32>
    tpu.vector_store %arg8[%c0_19, %c0_20], %33 {strides = array<i32>} : memref<2x128xf32, #tpu.memory_space<vmem>>, vector<2x128xf32>,
    return
  }
  func.func @transform_0(%arg0: i32) -> (i32, i32, i32) {
    %c0_i32 = arith.constant 0 : i32
    %c0_i32_0 = arith.constant 0 : i32
    %c0_i32_1 = arith.constant 0 : i32
    return %arg0, %c0_i32, %c0_i32_0 : i32, i32, i32
  }
  func.func @transform_1(%arg0: i32) -> (i32, i32) {
    %c0_i32 = arith.constant 0 : i32
    %c0_i32_0 = arith.constant 0 : i32
    return %arg0, %c0_i32 : i32, i32
  }
  func.func @transform_2(%arg0: i32) -> (i32, i32) {
    %c0_i32 = arith.constant 0 : i32
    %c0_i32_0 = arith.constant 0 : i32
    %c0_i32_1 = arith.constant 0 : i32
    return %c0_i32, %c0_i32_0 : i32, i32
  }
  func.func @transform_3(%arg0: i32) -> (i32, i32) {
    %c0_i32 = arith.constant 0 : i32
    %c0_i32_0 = arith.constant 0 : i32
    %c0_i32_1 = arith.constant 0 : i32
    return %c0_i32, %c0_i32_0 : i32, i32
  }
  func.func @transform_4(%arg0: i32) -> (i32, i32) {
    %c0_i32 = arith.constant 0 : i32
    %c0_i32_0 = arith.constant 0 : i32
    %c0_i32_1 = arith.constant 0 : i32
    return %c0_i32, %c0_i32_0 : i32, i32
  }
  func.func @transform_5(%arg0: i32) -> (i32, i32) {
    %c0_i32 = arith.constant 0 : i32
    %c0_i32_0 = arith.constant 0 : i32
    %c0_i32_1 = arith.constant 0 : i32
    return %c0_i32, %c0_i32_0 : i32, i32
  }
  func.func @transform_6(%arg0: i32) -> (i32, i32) {
    %c0_i32 = arith.constant 0 : i32
    %c0_i32_0 = arith.constant 0 : i32
    %c0_i32_1 = arith.constant 0 : i32
    return %c0_i32, %c0_i32_0 : i32, i32
  }
  func.func @transform_7(%arg0: i32) -> (i32, i32) {
    %c0_i32 = arith.constant 0 : i32
    %c0_i32_0 = arith.constant 0 : i32
    return %arg0, %c0_i32 : i32, i32
  }
}

</mosaic_0001>

<llo_original>
// kernel: tpu_custom_call.1
$region0: #{tpu_custom_call.1}
  #allocation0 [shape = 'u32[]', space=smem, size = 0x4, offset = 0x4, fixed_abs, tag = 'smem constant byte address 0x4 - core index']
  #allocation1 [shape = 'u32[144,128]{1,0:T(1,128)}', space=vmem, size = 0x12000, scoped, tag = 'internal scratch']
  %s0 = inlined_call_operand.hbm [shape: f32[2,8,32], index: 0, kind: input, shape index: {}]
  %s1 = inlined_call_operand.vmem [shape: f32[2,8], index: 1, kind: input, shape index: {}]
  %s2 = inlined_call_operand.hbm [shape: f32[32,32], index: 2, kind: input, shape index: {}]
  %s3 = inlined_call_operand.vmem [shape: f32[1,32], index: 3, kind: input, shape index: {}]
  %s4 = inlined_call_operand.vmem [shape: f32[1,32], index: 4, kind: input, shape index: {}]
  %s5 = inlined_call_operand.hbm [shape: f32[32,128], index: 5, kind: input, shape index: {}]
  %s6 = inlined_call_operand.vmem [shape: f32[1,128], index: 6, kind: input, shape index: {}]
  %s7 = inlined_call_operand.hbm [shape: f32[2,128], index: 7, kind: output, shape index: {}]
  %s8 = sld [smem:[#allocation0]]
  $region50: #{tpu_custom_call.1} parent=0
    _
  %s10 = ssub.s32 1, %s8
  %s11 = scalar_select 0, %s10, %s8
  $region1: #{tpu_custom_call.1} parent=0
    #allocation2 [shape = 'u8[8192]{0}', space=vmem, size = 0x2000, scoped, tag = 'input window, operand 0, single buffered']
    #allocation3 [shape = 's32[1]{0}', space=sflag, size = 0x4, scoped, tag = 'scoped memory for tpu_custom_call.1']
    #allocation4 [shape = 's32[1]{0}', space=sflag, size = 0x4, scoped, tag = 'scoped memory for tpu_custom_call.1']
    #allocation5 [shape = 'u8[16384]{0}', space=vmem, size = 0x4000, scoped, tag = 'input window, operand 2, single buffered']
    #allocation6 [shape = 's32[1]{0}', space=sflag, size = 0x4, scoped, tag = 'scoped memory for tpu_custom_call.1']
    #allocation7 [shape = 'u8[16384]{0}', space=vmem, size = 0x4000, scoped, tag = 'input window, operand 5, single buffered']
    #allocation8 [shape = 'u8[1024]{0}', space=vmem, size = 0x400, scoped, tag = 'output window, operand 0, single buffered']
    %12 = vsyncpa [#allocation3], 0
    %13 = vsyncpa [#allocation6], 0
    %14 = vsyncpa [#allocation4], 0
    // Predicated region
    $region2: #{tpu_custom_call.1} parent=1 // pred_check
      _
    $region3: #{tpu_custom_call.1} parent=1 // pred_check_branch
      %16 = sbr.rel (0) target = $region5
    $region4: #{tpu_custom_call.1} parent=1 // pred_region
      %s18 = ssub.s32 256, 256
      %19 = vsyncadd [#allocation3], %s18
      %s20 = sshll.u32 [#allocation2], 4
      %s21 = int_to_ptr.vmem [resolvable:$true] %s20
      %26 = dma.hbm_to_vmem [thread:$0]  %s0, 256, %s21, [#allocation3], 128, 128, 8
    $region5: #{tpu_custom_call.1} parent=1 // pred_fallthru
      _
    // Predicated region
    $region6: #{tpu_custom_call.1} parent=1 // pred_check
      _
    $region7: #{tpu_custom_call.1} parent=1 // pred_check_branch
      %28 = sbr.rel (0) target = $region9
    $region8: #{tpu_custom_call.1} parent=1 // pred_region
      _
    $region9: #{tpu_custom_call.1} parent=1 // pred_fallthru
      _
    // Predicated region
    $region10: #{tpu_custom_call.1} parent=1 // pred_check
      _
    $region11: #{tpu_custom_call.1} parent=1 // pred_check_branch
      %30 = sbr.rel (0) target = $region13
    $region12: #{tpu_custom_call.1} parent=1 // pred_region
      %s32 = ssub.s32 512, 512
      %33 = vsyncadd [#allocation6], %s32
      %s34 = sshll.u32 [#allocation5], 4
      %s35 = int_to_ptr.vmem [resolvable:$true] %s34
      %40 = dma.hbm_to_vmem [thread:$0]  %s2, 512, %s35, [#allocation6], 128, 128, 8
    $region13: #{tpu_custom_call.1} parent=1 // pred_fallthru
      _
    // Predicated region
    $region14: #{tpu_custom_call.1} parent=1 // pred_check
      _
    $region15: #{tpu_custom_call.1} parent=1 // pred_check_branch
      %42 = sbr.rel (0) target = $region17
    $region16: #{tpu_custom_call.1} parent=1 // pred_region
      _
    $region17: #{tpu_custom_call.1} parent=1 // pred_fallthru
      _
    // Predicated region
    $region18: #{tpu_custom_call.1} parent=1 // pred_check
      _
    $region19: #{tpu_custom_call.1} parent=1 // pred_check_branch
      %44 = sbr.rel (0) target = $region21
    $region20: #{tpu_custom_call.1} parent=1 // pred_region
      _
    $region21: #{tpu_custom_call.1} parent=1 // pred_fallthru
      _
    // Predicated region
    $region22: #{tpu_custom_call.1} parent=1 // pred_check
      _
    $region23: #{tpu_custom_call.1} parent=1 // pred_check_branch
      %46 = sbr.rel (0) target = $region25
    $region24: #{tpu_custom_call.1} parent=1 // pred_region
      %s48 = ssub.s32 512, 512
      %49 = vsyncadd [#allocation6], %s48
      %s50 = sshll.u32 [#allocation7], 4
      %s51 = int_to_ptr.vmem [resolvable:$true] %s50
      %56 = dma.hbm_to_vmem [thread:$0]  %s5, 512, %s51, [#allocation6], 128, 128, 8
    $region25: #{tpu_custom_call.1} parent=1 // pred_fallthru
      _
    // Predicated region
    $region26: #{tpu_custom_call.1} parent=1 // pred_check
      _
    $region27: #{tpu_custom_call.1} parent=1 // pred_check_branch
      %58 = sbr.rel (0) target = $region29
    $region28: #{tpu_custom_call.1} parent=1 // pred_region
      _
    $region29: #{tpu_custom_call.1} parent=1 // pred_fallthru
      _
    // Predicated region
    $region30: #{tpu_custom_call.1} parent=1 // pred_check
      _
    $region31: #{tpu_custom_call.1} parent=1 // pred_check_branch
      %60 = sbr.rel (0) target = $region33
    $region32: #{tpu_custom_call.1} parent=1 // pred_region
      %61 = dma.done [#allocation3], 256
    $region33: #{tpu_custom_call.1} parent=1 // pred_fallthru
      _
    // Predicated region
    $region34: #{tpu_custom_call.1} parent=1 // pred_check
      _
    $region35: #{tpu_custom_call.1} parent=1 // pred_check_branch
      %63 = sbr.rel (0) target = $region37
    $region36: #{tpu_custom_call.1} parent=1 // pred_region
      %64 = dma.done [#allocation6], 512
    $region37: #{tpu_custom_call.1} parent=1 // pred_fallthru
      _
    // Predicated region
    $region38: #{tpu_custom_call.1} parent=1 // pred_check
      _
    $region39: #{tpu_custom_call.1} parent=1 // pred_check_branch
      %66 = sbr.rel (0) target = $region41
    $region40: #{tpu_custom_call.1} parent=1 // pred_region
      %67 = dma.done [#allocation6], 512
    $region41: #{tpu_custom_call.1} parent=1 // pred_fallthru
      _
    %v68 = vld [vmem:[#allocation2] sm:$0xff]
    %v69 = vld [vmem:[#allocation2 + $0x8] sm:$0xff]
    %v70 = vld [vmem:[%s1] sm:$0x3]
    %v71 = vld [vmem:[#allocation5] sm:$0xff]
    %v72 = vld [vmem:[#allocation5 + $0x8] sm:$0xff]
    %v73 = vld [vmem:[#allocation5 + $0x10] sm:$0xff]
    %v74 = vld [vmem:[#allocation5 + $0x18] sm:$0xff]
    %v75 = vld [vmem:[%s3] sm:$0x1]
    %v77 = vlaneseq
    %v78 = vshrl.u32 %v77, 7
    %v79 = vsub.s32 0, %v78
    %v80 = vrot.slane %v75, %v79
    %vm82 = vcmask 261120
    %v84 = vsel %vm82, %v68, 0
    %v87 = vsel %vm82, %v69, 0
    %89 = vmatprep.subr.mxu0 0.0
    %90 = vmatpush1.msra.mxu0 %v71
    %91 = vmatprep.subr.mxu0 0.0
    %92 = vmatpush1.msra.mxu0 %v72
    %93 = vmatprep.subr.mxu0 0.0
    %94 = vmatpush1.msra.mxu0 %v73
    %95 = vmatprep.subr.mxu0 0.0
    %96 = vmatpush1.msra.mxu0 %v74
    %97 = vmatprep.subr.mxu0 0.0
    %98 = vmatpush1.msra.mxu0 0.0
    %99 = vmatprep.subr.mxu0 0.0
    %100 = vmatpush1.msra.mxu0 0.0
    %101 = vmatprep.subr.mxu0 0.0
    %102 = vmatpush1.msra.mxu0 0.0
    %103 = vmatprep.subr.mxu0 0.0
    %104 = vmatpush1.msra.mxu0 0.0
    %105 = vmatprep.subr.mxu0 0.0
    %106 = vmatpush1.msra.mxu0 0.0
    %107 = vmatprep.subr.mxu0 0.0
    %108 = vmatpush1.msra.mxu0 0.0
    %109 = vmatprep.subr.mxu0 0.0
    %110 = vmatpush1.msra.mxu0 0.0
    %111 = vmatprep.subr.mxu0 0.0
    %112 = vmatpush1.msra.mxu0 0.0
    %113 = vmatprep.subr.mxu0 0.0
    %114 = vmatpush1.msra.mxu0 0.0
    %115 = vmatprep.subr.mxu0 0.0
    %116 = vmatpush1.msra.mxu0 0.0
    %117 = vmatprep.subr.mxu0 0.0
    %118 = vmatpush1.msra.mxu0 0.0
    %119 = vmatprep.subr.mxu0 0.0
    %120 = vmatpush1.msra.mxu0 0.0
    %121 = vmatprep.subr.mxu0 0.0
    %122 = vmatpush1.msra.mxu0 0.0
    %123 = vmatprep.subr.mxu0 0.0
    %124 = vmatpush1.msra.mxu0 0.0
    %125 = vmatprep.subr.mxu0 0.0
    %126 = vmatpush1.msra.mxu0 0.0
    %127 = vmatprep.subr.mxu0 0.0
    %128 = vmatpush1.msra.mxu0 0.0
    %129 = vmatprep.subr.mxu0 0.0
    %130 = vmatpush1.msra.mxu0 0.0
    %131 = vmatprep.subr.mxu0 0.0
    %132 = vmatpush1.msra.mxu0 0.0
    %133 = vmatprep.subr.mxu0 0.0
    %134 = vmatpush1.msra.mxu0 0.0
    %135 = vmatprep.subr.mxu0 0.0
    %136 = vmatpush1.msra.mxu0 0.0
    %137 = vmatprep.subr.mxu0 0.0
    %138 = vmatpush1.msra.mxu0 0.0
    %139 = vmatprep.subr.mxu0 0.0
    %140 = vmatpush1.msra.mxu0 0.0
    %141 = vmatprep.subr.mxu0 0.0
    %142 = vmatpush1.msra.mxu0 0.0
    %143 = vmatprep.subr.mxu0 0.0
    %144 = vmatpush1.msra.mxu0 0.0
    %145 = vmatprep.subr.mxu0 0.0
    %146 = vmatpush1.msra.mxu0 0.0
    %147 = vmatprep.subr.mxu0 0.0
    %148 = vmatpush1.msra.mxu0 0.0
    %149 = vmatprep.subr.mxu0 0.0
    %150 = vmatpush1.msra.mxu0 0.0
    %151 = vmatprep.subr.mxu0 0.0
    %152 = vmatpush1.msra.mxu0 0.0
    %153 = vmatprep.mubr.f32.mxu0 0.0
    %154 = vmatmul.mubr.f32.gmra.mrb[0].mxu0 %v84
    %v155 = vpop.f32.mrb[0].mxu0
    %v156 = vadd.f32 %v80, %v155
    %v157 = vpop.f32.mrb[0].mxu0
    %158 = vmatprep.mubr.f32.mxu0 0.0
    %159 = vmatmul.mubr.f32.gmra.mrb[0].mxu0 %v87
    %v160 = vpop.f32.mrb[0].mxu0
    %v161 = vadd.f32 %v80, %v160
    %v162 = vpop.f32.mrb[0].mxu0
    %163 = vdwg.mxu0
    %v164 = vtanh.pop %v156
    %v165 = vtanh.pop %v161
    %v166 = vld [vmem:[%s4] sm:$0x1]
    %v168 = vlaneseq
    %v169 = vshrl.u32 %v168, 7
    %v170 = vsub.s32 0, %v169
    %v171 = vrot.slane %v166, %v170
    %v173 = vmul.f32 %v164, %v171
    %v174 = vmul.f32 %v165, %v171
    %v175 = vsel %vm82, %v173, 0.0
    %176 = vadd.xlane.f32.xlu0 %v175
    %v177 = vpop.xlane.xlu0 %176
    %v178 = vsel %vm82, %v174, 0.0
    %179 = vadd.xlane.f32.xlu0 %v178
    %v180 = vpop.xlane.xlu0 %179
    %v183 = vlaneseq
    %v184 = vand.u32 %v183, 127
    %v185 = vlaneseq
    %v186 = vshrl.u32 %v185, 7
    %v187 = vsub.s32 %v184, %v186
    %v188 = vrot.slane %v177, %v187
    %v189 = vlaneseq
    %v190 = vshrl.u32 %v189, 7
    %v191 = vsub.s32 %v184, %v190
    %v192 = vrot.slane %v180, %v191
    %vm193 = vcmask 1041409
    %v194 = vsel %vm193, %v192, %v188
    %vm196 = vcmask 58368
    %v197 = vsel %vm196, %v194, -inf
    %198 = vmax.xlane.f32.xlu0 %v197
    %v199 = vpop.xlane.xlu0 %198
    %v201 = vlaneseq
    %v202 = vshrl.u32 %v201, 7
    %v203 = vsub.s32 0, %v202
    %v204 = vrot.slane %v199, %v203
    %v205 = vlaneseq
    %v206 = vshrl.u32 %v205, 7
    %v207 = vsub.s32 1, %v206
    %v208 = vrot.slane %v199, %v207
    %v211 = vsub.f32 %v177, %v204
    %v212 = vsub.f32 %v180, %v208
    %v213 = vmul.f32 %v211, 1.442695
    %v214 = vpow.pop %v213
    %v215 = vmul.f32 %v212, 1.442695
    %v216 = vpow.pop %v215
    %v218 = vlaneseq
    %v219 = vshrl.u32 %v218, 7
    %v220 = vsub.s32 0, %v219
    %v221 = vrot.slane %v70, %v220
    %223 = vbcast.lane.b32.xlu0 %v221, 256
    %v224 = vpop.permute.xlu0 %223
    %v225 = vlaneseq
    %v226 = vshrl.u32 %v225, 7
    %v227 = vsub.s32 1, %v226
    %v228 = vrot.slane %v70, %v227
    %230 = vbcast.lane.b32.xlu0 %v228, 256
    %v231 = vpop.permute.xlu0 %230
    %v234 = vmul.f32 %v214, %v224
    %v235 = vmul.f32 %v216, %v231
    %238 = vset.pattern.permute.xlu0 0
    %239 = vperm.xlu0 %238, %v234
    %v240 = vpop.permute.xlu0 %239
    %241 = vset.pattern.permute.xlu0 0
    %242 = vperm.xlu0 %241, %v235
    %v243 = vpop.permute.xlu0 %242
    %v244 = vlaneseq
    %v245 = vshrl.u32 %v244, 7
    %v246 = vsub.s32 %v184, %v245
    %v247 = vrot.slane %v240, %v246
    %v248 = vlaneseq
    %v249 = vshrl.u32 %v248, 7
    %v250 = vsub.s32 %v184, %v249
    %v251 = vrot.slane %v243, %v250
    %v252 = vsel %vm193, %v251, %v247
    %v254 = vsel %vm196, %v252, 0.0
    %255 = vadd.xlane.f32.xlu0 %v254
    %v256 = vpop.xlane.xlu0 %255
    %v257 = vrcp.pop %v256
    %v259 = vlaneseq
    %v260 = vshrl.u32 %v259, 7
    %v261 = vsub.s32 0, %v260
    %v262 = vrot.slane %v257, %v261
    %v263 = vlaneseq
    %v264 = vshrl.u32 %v263, 7
    %v265 = vsub.s32 1, %v264
    %v266 = vrot.slane %v257, %v265
    %v269 = vmul.f32 %v234, %v262
    %v270 = vmul.f32 %v235, %v266
    %272 = vset.pattern.permute.xlu0 0
    %273 = vperm.xlu0 %272, %v269
    %v274 = vpop.permute.xlu0 %273
    %277 = vset.pattern.permute.xlu0 0
    %278 = vperm.xlu0 %277, %v270
    %v279 = vpop.permute.xlu0 %278
    %v281 = vmul.f32 %v68, %v274
    %v282 = vmul.f32 %v69, %v279
    %v283 = vsel %vm82, %v281, 0.0
    %v284 = vrot.slane %v283, 4
    %v285 = vadd.f32 %v283, %v284
    %v286 = vrot.slane %v285, 2
    %v287 = vadd.f32 %v285, %v286
    %v288 = vrot.slane %v287, 1
    %v289 = vadd.f32 %v287, %v288
    %v290 = vsel %vm82, %v282, 0.0
    %v291 = vrot.slane %v290, 4
    %v292 = vadd.f32 %v290, %v291
    %v293 = vrot.slane %v292, 2
    %v294 = vadd.f32 %v292, %v293
    %v295 = vrot.slane %v294, 1
    %v296 = vadd.f32 %v294, %v295
    %v297 = vld [vmem:[#allocation7] sm:$0xff]
    %v298 = vld [vmem:[#allocation7 + $0x8] sm:$0xff]
    %v299 = vld [vmem:[#allocation7 + $0x10] sm:$0xff]
    %v300 = vld [vmem:[#allocation7 + $0x18] sm:$0xff]
    %v301 = vld [vmem:[%s6] sm:$0x1]
    %v303 = vlaneseq
    %v304 = vshrl.u32 %v303, 7
    %v305 = vsub.s32 0, %v304
    %v306 = vrot.slane %v301, %v305
    %v310 = vsel %vm193, %v296, %v289
    %v311 = vsel %vm82, %v310, 0
    %313 = vmatprep.subr.mxu0 0.0
    %314 = vmatpush1.msra.mxu0 %v297
    %315 = vmatprep.subr.mxu0 0.0
    %316 = vmatpush1.msra.mxu0 %v298
    %317 = vmatprep.subr.mxu0 0.0
    %318 = vmatpush1.msra.mxu0 %v299
    %319 = vmatprep.subr.mxu0 0.0
    %320 = vmatpush1.msra.mxu0 %v300
    %321 = vmatprep.subr.mxu0 0.0
    %322 = vmatpush1.msra.mxu0 0.0
    %323 = vmatprep.subr.mxu0 0.0
    %324 = vmatpush1.msra.mxu0 0.0
    %325 = vmatprep.subr.mxu0 0.0
    %326 = vmatpush1.msra.mxu0 0.0
    %327 = vmatprep.subr.mxu0 0.0
    %328 = vmatpush1.msra.mxu0 0.0
    %329 = vmatprep.subr.mxu0 0.0
    %330 = vmatpush1.msra.mxu0 0.0
    %331 = vmatprep.subr.mxu0 0.0
    %332 = vmatpush1.msra.mxu0 0.0
    %333 = vmatprep.subr.mxu0 0.0
    %334 = vmatpush1.msra.mxu0 0.0
    %335 = vmatprep.subr.mxu0 0.0
    %336 = vmatpush1.msra.mxu0 0.0
    %337 = vmatprep.subr.mxu0 0.0
    %338 = vmatpush1.msra.mxu0 0.0
    %339 = vmatprep.subr.mxu0 0.0
    %340 = vmatpush1.msra.mxu0 0.0
    %341 = vmatprep.subr.mxu0 0.0
    %342 = vmatpush1.msra.mxu0 0.0
    %343 = vmatprep.subr.mxu0 0.0
    %344 = vmatpush1.msra.mxu0 0.0
    %345 = vmatprep.subr.mxu0 0.0
    %346 = vmatpush1.msra.mxu0 0.0
    %347 = vmatprep.subr.mxu0 0.0
    %348 = vmatpush1.msra.mxu0 0.0
    %349 = vmatprep.subr.mxu0 0.0
    %350 = vmatpush1.msra.mxu0 0.0
    %351 = vmatprep.subr.mxu0 0.0
    %352 = vmatpush1.msra.mxu0 0.0
    %353 = vmatprep.subr.mxu0 0.0
    %354 = vmatpush1.msra.mxu0 0.0
    %355 = vmatprep.subr.mxu0 0.0
    %356 = vmatpush1.msra.mxu0 0.0
    %357 = vmatprep.subr.mxu0 0.0
    %358 = vmatpush1.msra.mxu0 0.0
    %359 = vmatprep.subr.mxu0 0.0
    %360 = vmatpush1.msra.mxu0 0.0
    %361 = vmatprep.subr.mxu0 0.0
    %362 = vmatpush1.msra.mxu0 0.0
    %363 = vmatprep.subr.mxu0 0.0
    %364 = vmatpush1.msra.mxu0 0.0
    %365 = vmatprep.subr.mxu0 0.0
    %366 = vmatpush1.msra.mxu0 0.0
    %367 = vmatprep.subr.mxu0 0.0
    %368 = vmatpush1.msra.mxu0 0.0
    %369 = vmatprep.subr.mxu0 0.0
    %370 = vmatpush1.msra.mxu0 0.0
    %371 = vmatprep.subr.mxu0 0.0
    %372 = vmatpush1.msra.mxu0 0.0
    %373 = vmatprep.subr.mxu0 0.0
    %374 = vmatpush1.msra.mxu0 0.0
    %375 = vmatprep.subr.mxu0 0.0
    %376 = vmatpush1.msra.mxu0 0.0
    %377 = vmatprep.mubr.f32.mxu0 0.0
    %378 = vmatmul.mubr.f32.gmra.mrb[0].mxu0 %v311
    %v379 = vpop.f32.mrb[0].mxu0
    %v380 = vadd.f32 %v306, %v379
    %v381 = vpop.f32.mrb[0].mxu0
    %382 = vdwg.mxu0
    %383 = vst [vmem:[#allocation8] sm:$0x3] %v380
    // Predicated region
    $region42: #{tpu_custom_call.1} parent=1 // pred_check
      _
    $region43: #{tpu_custom_call.1} parent=1 // pred_check_branch
      %385 = sbr.rel (0) target = $region45
    $region44: #{tpu_custom_call.1} parent=1 // pred_region
      %s387 = ssub.s32 32, 32
      %388 = vsyncadd [#allocation4], %s387
      %s390 = sshll.u32 [#allocation8], 4
      %s391 = int_to_ptr.vmem [resolvable:$true] %s390
      %393 = dma.vmem_to_hbm [thread:$0]  %s391, 32, %s7, [#allocation4]
    $region45: #{tpu_custom_call.1} parent=1 // pred_fallthru
      _
    // Predicated region
    $region46: #{tpu_custom_call.1} parent=1 // pred_check
      _
    $region47: #{tpu_custom_call.1} parent=1 // pred_check_branch
      %395 = sbr.rel (0) target = $region49
    $region48: #{tpu_custom_call.1} parent=1 // pred_region
      %396 = dma.done [#allocation4], 32
    $region49: #{tpu_custom_call.1} parent=1 // pred_fallthru
      _
    %397 = vsyncpa [#allocation3], 1
    %398 = vsyncpa [#allocation6], 1
    %399 = vsyncpa [#allocation4], 1

</llo_original>
